<compile_context>
chip_gen: v7x
topology: tpu7x:2x2x1
jax: 0.10.0
libtpu: 0.0.40
codegen_flags: <defaults>
</compile_context>

<pallas_src>
import functools

import jax
import jax.numpy as jnp
from jax.experimental import pallas as pl
from jax.experimental.pallas import tpu as pltpu


def _skl_kernel(t_ref, s_ref, out_ref, acc_ref, *, inv_temp):
    i = pl.program_id(1)  # tile index along the reduction ("arbitrary") axis

    t = t_ref[...].astype(jnp.float32) * inv_temp
    s = s_ref[...].astype(jnp.float32) * inv_temp

    # Shifted logits (the only two full-tile temps we need to keep around).
    z_t = t - jnp.max(t, axis=-1, keepdims=True)
    z_s = s - jnp.max(s, axis=-1, keepdims=True)

    e_t = jnp.exp(z_t)                                   # single EUP exp pass / input
    e_s = jnp.exp(z_s)
    den_t = jnp.sum(e_t, axis=-1, keepdims=True)         # lane reduce (XLU)
    den_s = jnp.sum(e_s, axis=-1, keepdims=True)

    # d = p_s - p_t; e_t / e_s are consumed here (exact reciprocal: keeps the
    # division off the VALU without hurting the 1e-6-level tolerance).
    d = (e_s * pl.reciprocal(den_s, approx=False)
         - e_t * pl.reciprocal(den_t, approx=False))
    dz = z_s - z_t

    # Per-row symmetric KL:
    #   sum((p_s - p_t) * (log p_s - log p_t))
    # = sum(d * dz) - (log D_s - log D_t) * sum(d)
    log_ratio = jnp.log(den_s) - jnp.log(den_t)                       # (tm, 1)
    row = (jnp.sum(d * dz, axis=-1, keepdims=True)
           - log_ratio * jnp.sum(d, axis=-1, keepdims=True))          # (tm, 1)

    @pl.when(i == 0)
    def _():
        acc_ref[...] = jnp.zeros_like(acc_ref)

    acc_ref[...] += row

    # Collapse to a scalar + touch SMEM only once per split.
    @pl.when(i == pl.num_programs(1) - 1)
    def _():
        out_ref[0, 0] = jnp.sum(acc_ref[...])


def _hw_info():
    try:
        return pltpu.get_tpu_info()
    except Exception:
        return None


def skl_loss(score_t, score_s, temperature=5.0, tile_rows=None):
    """Symmetric KL distillation loss. score_t, score_s: [N, C]. Returns scalar f32."""
    assert score_t.shape == score_s.shape and score_t.ndim == 2
    N, C = score_t.shape
    n_elem = N * C  # KLDivLoss 'mean' divides by ALL elements

    # --- pad class axis (lanes) to a multiple of 128 with a large negative ----
    # exp(pad - max) underflows to exactly 0, so padded lanes contribute 0.
    c_pad = ((C + 127) // 128) * 128
    if c_pad != C:
        score_t = jnp.pad(score_t, ((0, 0), (0, c_pad - C)), constant_values=-1e9)
        score_s = jnp.pad(score_s, ((0, 0), (0, c_pad - C)), constant_values=-1e9)

    dtype_bytes = jnp.dtype(score_t.dtype).itemsize
    sub = 16 if dtype_bytes < 4 else 8           # sublane alignment (bf16 packs x2)
    n_round = ((N + sub - 1) // sub) * sub

    # --- hardware-aware sizing (VMEM capacity, TensorCore count) --------------
    info = _hw_info()
    vmem_cap = None
    n_cores = 1
    if info is not None:
        for attr in ("vmem_capacity_bytes", "vmem_bytes"):
            v = getattr(info, attr, None)
            if isinstance(v, int) and v > 0:
                vmem_cap = v
                break
        for attr in ("num_cores", "core_count", "tensorcore_count", "num_tensorcores"):
            v = getattr(info, attr, None)
            if isinstance(v, int) and v > 0:
                n_cores = v
                break
    if vmem_cap is None:
        vmem_cap = 64 * 1024 * 1024              # conservative: v7x physical VMEM

    # --- choose row tile: 2 inputs x 2 buffers + ~4 live f32 full-tile temps --
    if tile_rows is None:
        n_temps = 4
        per_row_bytes = c_pad * (4 * dtype_bytes + 4 * n_temps)
        budget = max(int(0.35 * vmem_cap), 4 * 1024 * 1024)
        tm = budget // per_row_bytes
    else:
        tm = tile_rows
    tm = int(max(sub, min(tm, 2048)))
    tm = max(sub, (tm // sub) * sub)
    tm = min(tm, n_round)

    # --- grid: (parallel core split, arbitrary tile/reduction axis) -----------
    tiles = -(-N // tm)
    nsplit = n_cores if (n_cores > 1 and tiles >= 2) else 1
    nsplit = max(1, min(nsplit, tiles))
    tiles_per_split = -(-tiles // nsplit)
    n_pad = nsplit * tiles_per_split * tm
    if n_pad != N:
        # zero rows -> identical uniform t/s softmax -> exact zero contribution
        score_t = jnp.pad(score_t, ((0, n_pad - N), (0, 0)))
        score_s = jnp.pad(score_s, ((0, n_pad - N), (0, 0)))

    kernel = functools.partial(_skl_kernel, inv_temp=1.0 / float(temperature))

    in_map = lambda c, i: (c * tiles_per_split + i, 0)

    # Small blocks expose DMA latency -> ask for a third input buffer.
    block_bytes = tm * c_pad * dtype_bytes
    n_buffers = 3 if (block_bytes < 512 * 1024 and tiles_per_split >= 4) else 2

    def make_in_spec():
        if n_buffers > 2:
            try:
                return pl.BlockSpec((tm, c_pad), in_map,
                                    pipeline_mode=pl.Buffered(n_buffers))
            except TypeError:
                pass
        return pl.BlockSpec((tm, c_pad), in_map)

    vmem_limit = int(min(int(0.75 * vmem_cap), 96 * 1024 * 1024))

    partials = pl.pallas_call(
        kernel,
        out_shape=jax.ShapeDtypeStruct((nsplit, 1), jnp.float32),
        grid_spec=pltpu.PrefetchScalarGridSpec(
            num_scalar_prefetch=0,
            grid=(nsplit, tiles_per_split),
            in_specs=[make_in_spec(), make_in_spec()],
            out_specs=pl.BlockSpec(
                (1, 1), lambda c, i: (c, 0), memory_space=pltpu.SMEM
            ),
            scratch_shapes=[pltpu.VMEM((tm, 1), jnp.float32)],
        ),
        compiler_params=pltpu.CompilerParams(
            dimension_semantics=("parallel", "arbitrary"),
            vmem_limit_bytes=vmem_limit,
        ),
    )(score_t, score_s)

    return 0.5 * jnp.sum(partials) / n_elem


def _skl_ref(score_t, score_s, temperature=5.0):
    """Pure-JAX reference for validation."""
    log_t = jax.nn.log_softmax(score_t / temperature, axis=1)
    log_s = jax.nn.log_softmax(score_s / temperature, axis=1)
    p_t = jnp.exp(log_t)
    p_s = jnp.exp(log_s)
    kl_ts = jnp.mean(p_s * (log_s - log_t))
    kl_st = jnp.mean(p_t * (log_t - log_s))
    return 0.5 * (kl_ts + kl_st)


if __name__ == "__main__":
    key = jax.random.PRNGKey(0)
    k1, k2, k3, k4 = jax.random.split(key, 4)

    # Case 1: small aligned shape (single tile, single split).
    N, C = 8, 128
    score_t = jax.random.normal(k1, (N, C), dtype=jnp.float32)
    score_s = jax.random.normal(k2, (N, C), dtype=jnp.float32)
    loss1 = jax.block_until_ready(skl_loss(score_t, score_s, temperature=5.0))
    ref1 = jax.block_until_ready(_skl_ref(score_t, score_s, temperature=5.0))
    assert jnp.isfinite(loss1)
    assert abs(float(loss1) - float(ref1)) < 5e-6, (float(loss1), float(ref1))

    # Case 2: unaligned shape exercising row/column padding and multi-tile
    # accumulation into the VMEM scratch.
    N2, C2 = 24, 200
    t2 = jax.random.normal(k3, (N2, C2), dtype=jnp.float32)
    s2 = jax.random.normal(k4, (N2, C2), dtype=jnp.float32)
    loss2 = jax.block_until_ready(skl_loss(t2, s2, temperature=5.0, tile_rows=8))
    ref2 = jax.block_until_ready(_skl_ref(t2, s2, temperature=5.0))
    assert jnp.isfinite(loss2)
    assert abs(float(loss2) - float(ref2)) < 5e-6, (float(loss2), float(ref2))

    print("KERNEL_OK")
</pallas_src>

<mosaic_0001>
module attributes {stable_mosaic.version = 11 : i64} {
  func.func @_skl_kernel(%arg0: i32, %arg1: i32, %arg2: memref<8x128xf32, #tpu.memory_space<vmem>>, %arg3: memref<8x128xf32, #tpu.memory_space<vmem>>, %arg4: memref<1x1xf32, #tpu.memory_space<smem>>, %arg5: memref<8x1xf32, #tpu.memory_space<vmem>>) attributes {dimension_semantics = [#tpu.dimension_semantics<parallel>, #tpu.dimension_semantics<arbitrary>], iteration_bounds = array<i64: 1, 1>, scalar_prefetch = 0 : i64, scratch_operands = 1 : i64, tpu.core_type = #tpu.core_type<tc>, window_params = [{transform_indices = @transform_0, window_bounds = array<i64: 8, 128>}, {transform_indices = @transform_1, window_bounds = array<i64: 8, 128>}, {transform_indices = @transform_2, window_bounds = array<i64: 1, 1>}]} {
    %c0 = arith.constant 0 : index
    %c0_0 = arith.constant 0 : index
    %0 = vector.load %arg2[%c0, %c0_0] : memref<8x128xf32, #tpu.memory_space<vmem>>, vector<8x128xf32>
    %cst = arith.constant 2.000000e-01 : f32
    %1 = vector.broadcast %cst : f32 to vector<8x128xf32>
    %2 = arith.mulf %0, %1 : vector<8x128xf32>
    %c0_1 = arith.constant 0 : index
    %c0_2 = arith.constant 0 : index
    %3 = vector.load %arg3[%c0_1, %c0_2] : memref<8x128xf32, #tpu.memory_space<vmem>>, vector<8x128xf32>
    %cst_3 = arith.constant 2.000000e-01 : f32
    %4 = vector.broadcast %cst_3 : f32 to vector<8x128xf32>
    %5 = arith.mulf %3, %4 : vector<8x128xf32>
    %cst_4 = arith.constant dense<0xFF800000> : vector<8xf32>
    %6 = vector.multi_reduction <maximumf>, %2, %cst_4 [1] : vector<8x128xf32> to vector<8xf32>
    %7 = vector.shape_cast %6 : vector<8xf32> to vector<8x1xf32>
    %8 = vector.broadcast %7 : vector<8x1xf32> to vector<8x128xf32>
    %9 = arith.subf %2, %8 : vector<8x128xf32>
    %cst_5 = arith.constant dense<0xFF800000> : vector<8xf32>
    %10 = vector.multi_reduction <maximumf>, %5, %cst_5 [1] : vector<8x128xf32> to vector<8xf32>
    %11 = vector.shape_cast %10 : vector<8xf32> to vector<8x1xf32>
    %12 = vector.broadcast %11 : vector<8x1xf32> to vector<8x128xf32>
    %13 = arith.subf %5, %12 : vector<8x128xf32>
    %14 = math.exp %9 : vector<8x128xf32>
    %15 = math.exp %13 : vector<8x128xf32>
    %cst_6 = arith.constant dense<0.000000e+00> : vector<8xf32>
    %16 = vector.multi_reduction <add>, %14, %cst_6 [1] : vector<8x128xf32> to vector<8xf32>
    %17 = vector.shape_cast %16 : vector<8xf32> to vector<8x1xf32>
    %cst_7 = arith.constant dense<0.000000e+00> : vector<8xf32>
    %18 = vector.multi_reduction <add>, %15, %cst_7 [1] : vector<8x128xf32> to vector<8xf32>
    %19 = vector.shape_cast %18 : vector<8xf32> to vector<8x1xf32>
    %20 = tpu.reciprocal %19 : vector<8x1xf32> -> vector<8x1xf32>
    %21 = vector.broadcast %20 : vector<8x1xf32> to vector<8x128xf32>
    %22 = arith.mulf %15, %21 : vector<8x128xf32>
    %23 = tpu.reciprocal %17 : vector<8x1xf32> -> vector<8x1xf32>
    %24 = vector.broadcast %23 : vector<8x1xf32> to vector<8x128xf32>
    %25 = arith.mulf %14, %24 : vector<8x128xf32>
    %26 = arith.subf %22, %25 : vector<8x128xf32>
    %27 = arith.subf %13, %9 : vector<8x128xf32>
    %28 = math.log %19 : vector<8x1xf32>
    %29 = math.log %17 : vector<8x1xf32>
    %30 = arith.subf %28, %29 : vector<8x1xf32>
    %31 = arith.mulf %26, %27 : vector<8x128xf32>
    %cst_8 = arith.constant dense<0.000000e+00> : vector<8xf32>
    %32 = vector.multi_reduction <add>, %31, %cst_8 [1] : vector<8x128xf32> to vector<8xf32>
    %33 = vector.shape_cast %32 : vector<8xf32> to vector<8x1xf32>
    %cst_9 = arith.constant dense<0.000000e+00> : vector<8xf32>
    %34 = vector.multi_reduction <add>, %26, %cst_9 [1] : vector<8x128xf32> to vector<8xf32>
    %35 = vector.shape_cast %34 : vector<8xf32> to vector<8x1xf32>
    %36 = arith.mulf %30, %35 : vector<8x1xf32>
    %37 = arith.subf %33, %36 : vector<8x1xf32>
    %c0_i32 = arith.constant 0 : i32
    %38 = arith.cmpi eq, %arg1, %c0_i32 : i32
    %39 = arith.extui %38 : i1 to i32
    %c0_i32_10 = arith.constant 0 : i32
    %40 = arith.cmpi ne, %39, %c0_i32_10 : i32
    scf.if %40 {
      %cst_17 = arith.constant 0.000000e+00 : f32
      %47 = vector.broadcast %cst_17 : f32 to vector<8x1xf32>
      %c0_18 = arith.constant 0 : index
      %c0_19 = arith.constant 0 : index
      %48 = vector.load %arg5[%c0_18, %c0_19] : memref<8x1xf32, #tpu.memory_space<vmem>>, vector<8x1xf32>
      tpu.vector_store %arg5[%c0_18, %c0_19], %47 {strides = array<i32>} : memref<8x1xf32, #tpu.memory_space<vmem>>, vector<8x1xf32>,
    } else {
    }
    %c0_11 = arith.constant 0 : index
    %c0_12 = arith.constant 0 : index
    %41 = vector.load %arg5[%c0_11, %c0_12] : memref<8x1xf32, #tpu.memory_space<vmem>>, vector<8x1xf32>
    %42 = arith.addf %41, %37 : vector<8x1xf32>
    %c0_13 = arith.constant 0 : index
    %c0_14 = arith.constant 0 : index
    %43 = vector.load %arg5[%c0_13, %c0_14] : memref<8x1xf32, #tpu.memory_space<vmem>>, vector<8x1xf32>
    tpu.vector_store %arg5[%c0_13, %c0_14], %42 {strides = array<i32>} : memref<8x1xf32, #tpu.memory_space<vmem>>, vector<8x1xf32>,
    %c0_i32_15 = arith.constant 0 : i32
    %44 = arith.cmpi eq, %arg1, %c0_i32_15 : i32
    %45 = arith.extui %44 : i1 to i32
    %c0_i32_16 = arith.constant 0 : i32
    %46 = arith.cmpi ne, %45, %c0_i32_16 : i32
    scf.if %46 {
      %c0_17 = arith.constant 0 : index
      %c0_18 = arith.constant 0 : index
      %47 = vector.load %arg5[%c0_17, %c0_18] : memref<8x1xf32, #tpu.memory_space<vmem>>, vector<8x1xf32>
      %48 = vector.shape_cast %47 : vector<8x1xf32> to vector<1x8x1xf32>
      %cst_19 = arith.constant dense<0.000000e+00> : vector<1xf32>
      %49 = vector.multi_reduction <add>, %48, %cst_19 [1, 2] : vector<1x8x1xf32> to vector<1xf32>
      %50 = vector.shape_cast %49 : vector<1xf32> to vector<1x1x1xf32>
      %51 = vector.extract %50[0, 0, 0] : f32 from vector<1x1x1xf32>
      %c0_20 = arith.constant 0 : index
      %c0_21 = arith.constant 0 : index
      %52 = memref.load %arg4[%c0_20, %c0_21] : memref<1x1xf32, #tpu.memory_space<smem>>
      memref.store %51, %arg4[%c0_20, %c0_21] : memref<1x1xf32, #tpu.memory_space<smem>>
    } else {
    }
    return
  }
  func.func @transform_0(%arg0: i32, %arg1: i32) -> (i32, i32) {
    %c1_i32 = arith.constant 1 : i32
    %0 = arith.muli %arg0, %c1_i32 : i32
    %1 = arith.addi %0, %arg1 : i32
    %c0_i32 = arith.constant 0 : i32
    %c0_i32_0 = arith.constant 0 : i32
    return %1, %c0_i32 : i32, i32
  }
  func.func @transform_1(%arg0: i32, %arg1: i32) -> (i32, i32) {
    %c1_i32 = arith.constant 1 : i32
    %0 = arith.muli %arg0, %c1_i32 : i32
    %1 = arith.addi %0, %arg1 : i32
    %c0_i32 = arith.constant 0 : i32
    %c0_i32_0 = arith.constant 0 : i32
    return %1, %c0_i32 : i32, i32
  }
  func.func @transform_2(%arg0: i32, %arg1: i32) -> (i32, i32) {
    %c0_i32 = arith.constant 0 : i32
    %c0_i32_0 = arith.constant 0 : i32
    return %arg0, %c0_i32 : i32, i32
  }
}

</mosaic_0001>

<llo_original>
// kernel: tpu_custom_call.1
$region0: #{tpu_custom_call.1}
  #allocation0 [shape = 'u32[]', space=smem, size = 0x4, offset = 0x4, fixed_abs, tag = 'smem constant byte address 0x4 - core index']
  #allocation1 [shape = 'u32[144,128]{1,0:T(1,128)}', space=vmem, size = 0x12000, scoped, tag = 'internal scratch']
  #allocation2 [shape = 'f32[8,1]{1,0:T(8,128)}', space=vmem, size = 0x1000, scoped, tag = 'scratch operand']
  %s0 = inlined_call_operand.hbm [shape: f32[8,128], index: 0, kind: input, shape index: {}]
  %s1 = inlined_call_operand.hbm [shape: f32[8,128], index: 1, kind: input, shape index: {}]
  %s2 = inlined_call_operand.hbm [shape: f32[1,1], index: 2, kind: output, shape index: {}]
  %s3 = sld [smem:[#allocation0]]
  $region34: #{tpu_custom_call.1} parent=0
    _
  %s5 = ssub.s32 1, %s3
  %s6 = scalar_select 0, %s5, %s3
  $region1: #{tpu_custom_call.1} parent=0
    #allocation3 [shape = 'u8[4096]{0}', space=vmem, size = 0x1000, scoped, tag = 'input window, operand 0, single buffered']
    #allocation4 [shape = 's32[1]{0}', space=sflag, size = 0x4, scoped, tag = 'scoped memory for tpu_custom_call.1']
    #allocation5 [shape = 's32[1]{0}', space=sflag, size = 0x4, scoped, tag = 'scoped memory for tpu_custom_call.1']
    #allocation6 [shape = 'u8[4096]{0}', space=vmem, size = 0x1000, scoped, tag = 'input window, operand 1, single buffered']
    #allocation7 [shape = 's32[1]{0}', space=sflag, size = 0x4, scoped, tag = 'scoped memory for tpu_custom_call.1']
    #allocation8 [shape = 'u8[512]{0}', space=smem, size = 0x200, scoped, tag = 'output window, operand 0, single buffered']
    %7 = vsyncpa [#allocation4], 0
    %8 = vsyncpa [#allocation7], 0
    %9 = vsyncpa [#allocation5], 0
    // Predicated region
    $region2: #{tpu_custom_call.1} parent=1 // pred_check
      _
    $region3: #{tpu_custom_call.1} parent=1 // pred_check_branch
      %11 = sbr.rel (0) target = $region5
    $region4: #{tpu_custom_call.1} parent=1 // pred_region
      %s12 = sadd.s32 0, 0
      %s14 = ssub.s32 128, 128
      %15 = vsyncadd [#allocation4], %s14
      %s16 = smul.addr %s12, 128
      %s17 = scalar_lea.hbm %s0, %s16
      %s19 = sshll.u32 [#allocation3], 4
      %s20 = int_to_ptr.vmem [resolvable:$true] %s19
      %22 = dma.hbm_to_vmem [thread:$0]  %s17, 128, %s20, [#allocation4]
    $region5: #{tpu_custom_call.1} parent=1 // pred_fallthru
      _
    // Predicated region
    $region6: #{tpu_custom_call.1} parent=1 // pred_check
      _
    $region7: #{tpu_custom_call.1} parent=1 // pred_check_branch
      %24 = sbr.rel (0) target = $region9
    $region8: #{tpu_custom_call.1} parent=1 // pred_region
      %s25 = sadd.s32 0, 0
      %s27 = ssub.s32 128, 128
      %28 = vsyncadd [#allocation7], %s27
      %s29 = smul.addr %s25, 128
      %s30 = scalar_lea.hbm %s1, %s29
      %s32 = sshll.u32 [#allocation6], 4
      %s33 = int_to_ptr.vmem [resolvable:$true] %s32
      %35 = dma.hbm_to_vmem [thread:$0]  %s30, 128, %s33, [#allocation7]
    $region9: #{tpu_custom_call.1} parent=1 // pred_fallthru
      _
    // Predicated region
    $region10: #{tpu_custom_call.1} parent=1 // pred_check
      _
    $region11: #{tpu_custom_call.1} parent=1 // pred_check_branch
      %37 = sbr.rel (0) target = $region13
    $region12: #{tpu_custom_call.1} parent=1 // pred_region
      %38 = dma.done [#allocation4], 128
    $region13: #{tpu_custom_call.1} parent=1 // pred_fallthru
      _
    // Predicated region
    $region14: #{tpu_custom_call.1} parent=1 // pred_check
      _
    $region15: #{tpu_custom_call.1} parent=1 // pred_check_branch
      %40 = sbr.rel (0) target = $region17
    $region16: #{tpu_custom_call.1} parent=1 // pred_region
      %41 = dma.done [#allocation7], 128
    $region17: #{tpu_custom_call.1} parent=1 // pred_fallthru
      _
    %s42 = sadd.s32 0, 0
    %s43 = sadd.s32 0, 0
    %v44 = vld [vmem:[#allocation3] sm:$0xff]
    %v45 = vmul.f32 %v44, 0.2
    %v46 = vld [vmem:[#allocation6] sm:$0xff]
    %v47 = vmul.f32 %v46, 0.2
    %48 = vmax.xlane.f32.xlu0 %v45
    %v49 = vpop.xlane.xlu0 %48
    %v50 = vsub.f32 %v45, %v49
    %51 = vmax.xlane.f32.xlu0 %v47
    %v52 = vpop.xlane.xlu0 %51
    %v53 = vsub.f32 %v47, %v52
    %v54 = vmul.f32 %v50, 1.442695
    %v55 = vpow.pop %v54
    %v56 = vmul.f32 %v53, 1.442695
    %v57 = vpow.pop %v56
    %58 = vadd.xlane.f32.xlu0 %v55
    %v59 = vpop.xlane.xlu0 %58
    %60 = vadd.xlane.f32.xlu0 %v57
    %v61 = vpop.xlane.xlu0 %60
    %v62 = vrcp.pop %v61
    %v63 = vmul.f32 %v57, %v62
    %v64 = vrcp.pop %v59
    %v65 = vmul.f32 %v55, %v64
    %v66 = vsub.f32 %v63, %v65
    %v67 = vsub.f32 %v53, %v50
    %v68 = vlog2.pop %v61
    %v69 = vmul.f32 %v68, 0.6931472
    %v70 = vlog2.pop %v59
    %v71 = vmul.f32 %v70, 0.6931472
    %v72 = vsub.f32 %v69, %v71
    %v73 = vmul.f32 %v66, %v67
    %74 = vadd.xlane.f32.xlu0 %v73
    %v75 = vpop.xlane.xlu0 %74
    %76 = vadd.xlane.f32.xlu0 %v66
    %v77 = vpop.xlane.xlu0 %76
    %v78 = vmul.f32 %v72, %v77
    %v79 = vsub.f32 %v75, %v78
    %p80 = scmp.eq.s32.totalorder 0, 0
    // Predicated region
    $region18: #{tpu_custom_call.1} parent=1 // pred_check
      %p81 = pneg %p80
    $region19: #{tpu_custom_call.1} parent=1 // pred_check_branch
      %83 = sbr.rel (%p81) target = $region21
    $region20: #{tpu_custom_call.1} parent=1 // pred_region
      %vm84 = vcmask 7168
      %85 = vst.msk [vmem:[#allocation2] sm:$0xff] %vm84, 0.0
    $region21: #{tpu_custom_call.1} parent=1 // pred_fallthru
      _
    %v86 = vld [vmem:[#allocation2] sm:$0xff]
    %v87 = vadd.f32 %v86, %v79
    %vm88 = vcmask 7168
    %89 = vst.msk [vmem:[#allocation2] sm:$0xff] %vm88, %v87
    // Predicated region
    $region22: #{tpu_custom_call.1} parent=1 // pred_check
      %p90 = pneg %p80
    $region23: #{tpu_custom_call.1} parent=1 // pred_check_branch
      %92 = sbr.rel (%p90) target = $region25
    $region24: #{tpu_custom_call.1} parent=1 // pred_region
      %v93 = vld [vmem:[#allocation2] sm:$0xff]
      %v94 = vsel %vm88, %v93, 0.0
      %95 = vadd.xlane.f32.xlu0 %v94
      %v96 = vpop.xlane.xlu0 %95
      %v97 = vrot.slane %v96, 4
      %v98 = vadd.f32 %v96, %v97
      %v99 = vrot.slane %v98, 2
      %v100 = vadd.f32 %v98, %v99
      %v101 = vrot.slane %v100, 1
      %v102 = vadd.f32 %v100, %v101
      %s103 = vtos %v102
      %s104 = scalar_lea.smem [#allocation8], 0
      %105 = sst [smem:[%s104]] %s103
    $region25: #{tpu_custom_call.1} parent=1 // pred_fallthru
      _
    // Predicated region
    $region26: #{tpu_custom_call.1} parent=1 // pred_check
      _
    $region27: #{tpu_custom_call.1} parent=1 // pred_check_branch
      %107 = sbr.rel (0) target = $region29
    $region28: #{tpu_custom_call.1} parent=1 // pred_region
      %s109 = ssub.s32 16, 16
      %110 = vsyncadd [#allocation5], %s109
      %113 = dma.smem_to_hbm [#allocation8], 16, %s2, [#allocation5]
    $region29: #{tpu_custom_call.1} parent=1 // pred_fallthru
      _
    // Predicated region
    $region30: #{tpu_custom_call.1} parent=1 // pred_check
      _
    $region31: #{tpu_custom_call.1} parent=1 // pred_check_branch
      %115 = sbr.rel (0) target = $region33
    $region32: #{tpu_custom_call.1} parent=1 // pred_region
      %116 = dma.done [#allocation5], 16
    $region33: #{tpu_custom_call.1} parent=1 // pred_fallthru
      _
    %117 = sfence
    %118 = vsyncpa [#allocation4], 1
    %119 = vsyncpa [#allocation7], 1
    %120 = vsyncpa [#allocation5], 1

</llo_original>
